<compile_context>
chip_gen: v7x
topology: tpu7x:2x2x1
jax: 0.10.0
libtpu: 0.0.40
codegen_flags: <defaults>
</compile_context>

<pallas_src>
import jax
import jax.numpy as jnp
from jax import lax
from jax.experimental import pallas as pl
from jax.experimental.pallas import tpu as pltpu

# Model hyper-parameters (from the PyTorch module)
encDict = {'a': 0, 'b': 1, 'c': 2, 'd': 3, '1': 4, '2': 4, '3': 4, '4': 4,
           '5': 4, '6': 4, '7': 4, '8': 4, '9': 4, 'PAD': 5}
NUM_EMB = len(set(encDict.values()))   # 6
PAD_IDX = NUM_EMB - 1                  # 5
EMB = 50                               # emb_dim
HID = 20                               # hid_dim

# Padded, lane/sublane-friendly sizes used by the kernel
NUM_EMB_P = 8                          # embedding rows padded to sublane multiple
HID_P = 32                             # hidden dim padded so 4*HID_P fills 128 lanes
GATE_P = 4 * HID_P                     # 128 fused gate lanes, blocks [i|f|o|g]

# Packed parameter layout (single (ROWS_P, 128) f32 array -> one DMA)
ROW_T = 0                              # rows 0..7   : T = emb @ W_ih_fused (g-block x2)
ROW_WHH = 8                            # rows 8..39  : W_hh fused (g-block x2)
ROW_TAIL = 40                          # row 40: bias (g-block x2), 41: fc_w, 42: fc_b
ROWS_P = 48


def lstm_fused_kernel(ids_ref, p_ref, out_ref):
    """Single-program kernel: folded gather+input projection + LSTM + fc + sigmoid.

    ids_ref : (L, 1)        int32  token ids
    p_ref   : (ROWS_P, 128) f32    packed parameters (see layout above)
    out_ref : (1, 1)        f32    sigmoid(fc(h_last))
    """
    L = ids_ref.shape[0]

    # ---- static views/loads of the packed parameter slab (all aligned blocks) ----
    tab = p_ref[ROW_T:ROW_T + NUM_EMB_P, :]              # (8, 128)  folded emb@W_ih
    whh = p_ref[ROW_WHH:ROW_WHH + HID_P, :]              # (32, 128) fused W_hh
    tail = p_ref[ROW_TAIL:ROW_TAIL + 8, :]               # (8, 128)  bias / fc_w / fc_b
    bias = tail[0:1, :]                                   # (1, 128)
    fcw = tail[1:2, :HID_P]                               # (1, 32)
    fcb = tail[2:3, 0:1]                                  # (1, 1)

    # ---- fused embedding gather + hoisted input projection: one (L,8)x(8,128) dot ----
    ids = ids_ref[...]                                               # (L, 1) int32
    iota = lax.broadcasted_iota(jnp.int32, (L, NUM_EMB_P), 1)        # (L, 8)
    one_hot = jnp.where(ids == iota, 1.0, 0.0).astype(jnp.float32)   # (L, 8)
    x_proj = jnp.dot(one_hot, tab,
                     preferred_element_type=jnp.float32) + bias      # (L, 128)

    # ---- recurrence: h/c live in vregs, loop fully unrolled (L is tiny/static) ----
    h = jnp.zeros((1, HID_P), jnp.float32)
    c = jnp.zeros((1, HID_P), jnp.float32)
    for t in range(L):
        gates = x_proj[t:t + 1, :] + jnp.dot(
            h, whh, preferred_element_type=jnp.float32)              # (1, 128)
        sig = jax.nn.sigmoid(gates)          # ONE EUP pass over all 128 lanes
        i_g = sig[:, 0 * HID_P:1 * HID_P]
        f_g = sig[:, 1 * HID_P:2 * HID_P]
        o_g = sig[:, 2 * HID_P:3 * HID_P]
        g_g = 2.0 * sig[:, 3 * HID_P:] - 1.0   # == tanh(preact), g-block pre-scaled x2
        c = f_g * c + i_g * g_g                # padded lanes stay exactly 0
        h = o_g * jnp.tanh(c)                  # padded lanes stay exactly 0

    # ---- final fc: VPU multiply + cross-lane reduce, then sigmoid ----
    logits = jnp.sum(h * fcw, axis=-1, keepdims=True) + fcb
    out_ref[...] = jax.nn.sigmoid(logits)


def make_params(key):
    """Deterministic parameter init in PyTorch layout (gate order [i, f, g, o])."""
    ks = jax.random.split(key, 7)
    emb_table = 0.1 * jax.random.normal(ks[0], (NUM_EMB, EMB), jnp.float32)
    emb_table = emb_table.at[PAD_IDX].set(0.0)          # padding_idx row is zero

    w_ih = 0.1 * jax.random.normal(ks[1], (4, EMB, HID), jnp.float32)
    w_hh = 0.1 * jax.random.normal(ks[2], (4, HID, HID), jnp.float32)
    b_ih = 0.1 * jax.random.normal(ks[3], (4, 1, HID), jnp.float32)
    b_hh = 0.1 * jax.random.normal(ks[4], (4, 1, HID), jnp.float32)
    bias = b_ih + b_hh

    fc_w = 0.1 * jax.random.normal(ks[5], (HID, 1), jnp.float32)
    fc_b = 0.1 * jax.random.normal(ks[6], (1, 1), jnp.float32)
    return {"embedding": emb_table, "w_ih": w_ih, "w_hh": w_hh,
            "bias": bias, "fc_w": fc_w, "fc_b": fc_b}


def fuse_params(params):
    """One-time offline fold/pack of raw params into the single kernel slab.

    - gate order remapped [i, f, g, o] -> fused lane blocks [i | f | o | g]
    - embedding folded into the input projection: T = emb @ W_ih_fused
    - g-gate block (lanes 96..127) of T / W_hh / bias pre-scaled by 2 so the
      kernel can use one sigmoid pass and recover tanh as 2*sigmoid(2x)-1
    """
    order = (0, 1, 3, 2)   # slot -> PyTorch gate index ([i, f, g, o] -> [i, f, o, g])

    wih = jnp.zeros((EMB, GATE_P), jnp.float32)
    whh = jnp.zeros((HID_P, GATE_P), jnp.float32)
    b = jnp.zeros((1, GATE_P), jnp.float32)
    for slot, g in enumerate(order):
        c0 = slot * HID_P
        wih = wih.at[:, c0:c0 + HID].set(params["w_ih"][g])
        whh = whh.at[:HID, c0:c0 + HID].set(params["w_hh"][g])
        b = b.at[:, c0:c0 + HID].set(params["bias"][g])

    # Fold embedding into the input projection (offline matmul, tiny).
    tab = jnp.dot(params["embedding"], wih)               # (NUM_EMB, 128)

    # Pre-scale the g-gate block by 2 (all contributors: T, W_hh, bias).
    gscale = jnp.where(jnp.arange(GATE_P) >= 3 * HID_P, 2.0, 1.0).astype(jnp.float32)
    tab = tab * gscale[None, :]
    whh = whh * gscale[None, :]
    b = b * gscale[None, :]

    packed = jnp.zeros((ROWS_P, GATE_P), jnp.float32)
    packed = packed.at[ROW_T:ROW_T + NUM_EMB, :].set(tab)
    packed = packed.at[ROW_WHH:ROW_WHH + HID_P, :].set(whh)
    packed = packed.at[ROW_TAIL, :].set(b[0])
    packed = packed.at[ROW_TAIL + 1, :HID].set(params["fc_w"][:, 0])
    packed = packed.at[ROW_TAIL + 2, 0].set(params["fc_b"][0, 0])
    return packed


def experiment_model_forward(x_ids, packed_params):
    """JAX/Pallas equivalent of experimentModel.forward. Returns shape (1,)."""
    ids2d = x_ids.astype(jnp.int32).reshape(-1, 1)      # (L, 1)
    out = pl.pallas_call(
        lstm_fused_kernel,
        out_shape=jax.ShapeDtypeStruct((1, 1), jnp.float32),
        in_specs=[pl.BlockSpec(memory_space=pltpu.MemorySpace.VMEM),
                  pl.BlockSpec(memory_space=pltpu.MemorySpace.VMEM)],
        out_specs=pl.BlockSpec(memory_space=pltpu.MemorySpace.VMEM),
    )(ids2d, packed_params)
    return out.reshape((1,))


def reference_forward(x_ids, params):
    """Pure-JAX reference of the same forward pass (for correctness check)."""
    emb = params["embedding"][x_ids]                     # (L, EMB)

    def step(carry, x_t):
        h, c = carry
        x_t = x_t[None, :]                               # (1, EMB)
        gates = [jnp.dot(x_t, params["w_ih"][g]) +
                 jnp.dot(h, params["w_hh"][g]) +
                 params["bias"][g] for g in range(4)]
        i = jax.nn.sigmoid(gates[0])
        f = jax.nn.sigmoid(gates[1])
        g = jnp.tanh(gates[2])
        o = jax.nn.sigmoid(gates[3])
        c = f * c + i * g
        h = o * jnp.tanh(c)
        return (h, c), None

    h0 = jnp.zeros((1, HID), jnp.float32)
    c0 = jnp.zeros((1, HID), jnp.float32)
    (h_last, _), _ = lax.scan(step, (h0, c0), emb)
    out = jnp.dot(h_last, params["fc_w"]) + params["fc_b"]
    return jax.nn.sigmoid(out).reshape((1,))


if __name__ == "__main__":
    key = jax.random.PRNGKey(0)
    params = make_params(key)
    packed = fuse_params(params)

    # Padded-lane invariant: every padded gate lane of T / W_hh / bias must be
    # exactly zero so padded lanes of h/c stay exactly zero inside the kernel
    # (and the padded fc_w lanes are zero so they cannot leak into the logit).
    pad_lane = (jnp.arange(GATE_P) % HID_P) >= HID
    assert bool(jnp.all(packed[ROW_T:ROW_T + NUM_EMB_P][:, pad_lane] == 0.0))
    assert bool(jnp.all(packed[ROW_WHH:ROW_WHH + HID_P][:, pad_lane] == 0.0))
    assert bool(jnp.all(packed[ROW_TAIL][pad_lane] == 0.0))
    assert bool(jnp.all(packed[ROW_TAIL + 1, HID:] == 0.0))

    # Small example input: a sequence of 8 token ids (as produced by encDict).
    x_ids = jnp.array([encDict['a'], encDict['1'], encDict['b'], encDict['2'],
                       encDict['c'], encDict['3'], encDict['d'], encDict['PAD']],
                      dtype=jnp.int32)          # shape (8,)

    out = experiment_model_forward(x_ids, packed)
    out = jax.block_until_ready(out)

    ref = reference_forward(x_ids, params)
    assert out.shape == (1,)
    assert jnp.allclose(out, ref, atol=1e-5, rtol=1e-5), (out, ref)

    print("KERNEL_OK")
</pallas_src>

<mosaic_0001>
module attributes {stable_mosaic.version = 11 : i64} {
  func.func @lstm_fused_kernel(%arg0: memref<8x1xi32, #tpu.memory_space<vmem>>, %arg1: memref<48x128xf32, #tpu.memory_space<vmem>>, %arg2: memref<1x1xf32, #tpu.memory_space<vmem>>) attributes {dimension_semantics = [], scalar_prefetch = 0 : i64, scratch_operands = 0 : i64, tpu.core_type = #tpu.core_type<tc>} {
    %c0 = arith.constant 0 : index
    %c0_0 = arith.constant 0 : index
    %0 = vector.load %arg1[%c0, %c0_0] : memref<48x128xf32, #tpu.memory_space<vmem>>, vector<8x128xf32>
    %c8 = arith.constant 8 : index
    %c0_1 = arith.constant 0 : index
    %1 = vector.load %arg1[%c8, %c0_1] : memref<48x128xf32, #tpu.memory_space<vmem>>, vector<32x128xf32>
    %c40 = arith.constant 40 : index
    %c0_2 = arith.constant 0 : index
    %2 = vector.load %arg1[%c40, %c0_2] : memref<48x128xf32, #tpu.memory_space<vmem>>, vector<8x128xf32>
    %3 = vector.extract_strided_slice %2 {offsets = [0, 0], sizes = [1, 128], strides = [1, 1]} : vector<8x128xf32> to vector<1x128xf32>
    %4 = vector.extract_strided_slice %2 {offsets = [1, 0], sizes = [1, 32], strides = [1, 1]} : vector<8x128xf32> to vector<1x32xf32>
    %5 = vector.extract_strided_slice %2 {offsets = [2, 0], sizes = [1, 1], strides = [1, 1]} : vector<8x128xf32> to vector<1x1xf32>
    %c0_3 = arith.constant 0 : index
    %c0_4 = arith.constant 0 : index
    %6 = vector.load %arg0[%c0_3, %c0_4] : memref<8x1xi32, #tpu.memory_space<vmem>>, vector<8x1xi32>
    %7 = tpu.iota {dimensions = array<i32: 1>} : vector<8x8xi32>
    %8 = vector.broadcast %6 : vector<8x1xi32> to vector<8x8xi32>
    %9 = arith.cmpi eq, %8, %7 : vector<8x8xi32>
    %cst = arith.constant 1.000000e+00 : f32
    %cst_5 = arith.constant 0.000000e+00 : f32
    %10 = vector.broadcast %cst : f32 to vector<8x8xf32>
    %11 = vector.broadcast %cst_5 : f32 to vector<8x8xf32>
    %12 = arith.select %9, %10, %11 : vector<8x8xi1>, vector<8x8xf32>
    %cst_6 = arith.constant dense<0.000000e+00> : vector<8x128xf32>
    %13 = tpu.matmul %12, %0, %cst_6 {dimension_numbers = #tpu.dot_dimension_numbers<[1], [0], [0], [1], [0, 0, 1, 1], [], []>} : vector<8x8xf32>, vector<8x128xf32>, vector<8x128xf32> -> vector<8x128xf32>
    %14 = vector.broadcast %3 : vector<1x128xf32> to vector<8x128xf32>
    %15 = arith.addf %13, %14 : vector<8x128xf32>
    %cst_7 = arith.constant 0.000000e+00 : f32
    %16 = vector.broadcast %cst_7 : f32 to vector<1x32xf32>
    %cst_8 = arith.constant 0.000000e+00 : f32
    %17 = vector.broadcast %cst_8 : f32 to vector<1x32xf32>
    %18 = vector.extract_strided_slice %15 {offsets = [0, 0], sizes = [1, 128], strides = [1, 1]} : vector<8x128xf32> to vector<1x128xf32>
    %cst_9 = arith.constant dense<0.000000e+00> : vector<1x128xf32>
    %19 = tpu.matmul %16, %1, %cst_9 {dimension_numbers = #tpu.dot_dimension_numbers<[1], [0], [0], [1], [0, 0, 1, 1], [], []>} : vector<1x32xf32>, vector<32x128xf32>, vector<1x128xf32> -> vector<1x128xf32>
    %20 = arith.addf %18, %19 : vector<1x128xf32>
    %21 = arith.negf %20 : vector<1x128xf32>
    %22 = math.exp %21 : vector<1x128xf32>
    %cst_10 = arith.constant 1.000000e+00 : f32
    %23 = vector.broadcast %cst_10 : f32 to vector<1x128xf32>
    %24 = arith.addf %23, %22 : vector<1x128xf32>
    %25 = arith.divf %23, %24 : vector<1x128xf32>
    %26 = vector.extract_strided_slice %25 {offsets = [0, 0], sizes = [1, 32], strides = [1, 1]} : vector<1x128xf32> to vector<1x32xf32>
    %27 = vector.extract_strided_slice %25 {offsets = [0, 32], sizes = [1, 32], strides = [1, 1]} : vector<1x128xf32> to vector<1x32xf32>
    %28 = vector.extract_strided_slice %25 {offsets = [0, 64], sizes = [1, 32], strides = [1, 1]} : vector<1x128xf32> to vector<1x32xf32>
    %29 = vector.extract_strided_slice %25 {offsets = [0, 96], sizes = [1, 32], strides = [1, 1]} : vector<1x128xf32> to vector<1x32xf32>
    %cst_11 = arith.constant 2.000000e+00 : f32
    %30 = vector.broadcast %cst_11 : f32 to vector<1x32xf32>
    %31 = arith.mulf %30, %29 : vector<1x32xf32>
    %cst_12 = arith.constant 1.000000e+00 : f32
    %32 = vector.broadcast %cst_12 : f32 to vector<1x32xf32>
    %33 = arith.subf %31, %32 : vector<1x32xf32>
    %34 = arith.mulf %27, %17 : vector<1x32xf32>
    %35 = arith.mulf %26, %33 : vector<1x32xf32>
    %36 = arith.addf %34, %35 : vector<1x32xf32>
    %37 = math.tanh %36 : vector<1x32xf32>
    %38 = arith.mulf %28, %37 : vector<1x32xf32>
    %39 = vector.extract_strided_slice %15 {offsets = [1, 0], sizes = [1, 128], strides = [1, 1]} : vector<8x128xf32> to vector<1x128xf32>
    %cst_13 = arith.constant dense<0.000000e+00> : vector<1x128xf32>
    %40 = tpu.matmul %38, %1, %cst_13 {dimension_numbers = #tpu.dot_dimension_numbers<[1], [0], [0], [1], [0, 0, 1, 1], [], []>} : vector<1x32xf32>, vector<32x128xf32>, vector<1x128xf32> -> vector<1x128xf32>
    %41 = arith.addf %39, %40 : vector<1x128xf32>
    %42 = arith.negf %41 : vector<1x128xf32>
    %43 = math.exp %42 : vector<1x128xf32>
    %cst_14 = arith.constant 1.000000e+00 : f32
    %44 = vector.broadcast %cst_14 : f32 to vector<1x128xf32>
    %45 = arith.addf %44, %43 : vector<1x128xf32>
    %46 = arith.divf %44, %45 : vector<1x128xf32>
    %47 = vector.extract_strided_slice %46 {offsets = [0, 0], sizes = [1, 32], strides = [1, 1]} : vector<1x128xf32> to vector<1x32xf32>
    %48 = vector.extract_strided_slice %46 {offsets = [0, 32], sizes = [1, 32], strides = [1, 1]} : vector<1x128xf32> to vector<1x32xf32>
    %49 = vector.extract_strided_slice %46 {offsets = [0, 64], sizes = [1, 32], strides = [1, 1]} : vector<1x128xf32> to vector<1x32xf32>
    %50 = vector.extract_strided_slice %46 {offsets = [0, 96], sizes = [1, 32], strides = [1, 1]} : vector<1x128xf32> to vector<1x32xf32>
    %cst_15 = arith.constant 2.000000e+00 : f32
    %51 = vector.broadcast %cst_15 : f32 to vector<1x32xf32>
    %52 = arith.mulf %51, %50 : vector<1x32xf32>
    %cst_16 = arith.constant 1.000000e+00 : f32
    %53 = vector.broadcast %cst_16 : f32 to vector<1x32xf32>
    %54 = arith.subf %52, %53 : vector<1x32xf32>
    %55 = arith.mulf %48, %36 : vector<1x32xf32>
    %56 = arith.mulf %47, %54 : vector<1x32xf32>
    %57 = arith.addf %55, %56 : vector<1x32xf32>
    %58 = math.tanh %57 : vector<1x32xf32>
    %59 = arith.mulf %49, %58 : vector<1x32xf32>
    %60 = vector.extract_strided_slice %15 {offsets = [2, 0], sizes = [1, 128], strides = [1, 1]} : vector<8x128xf32> to vector<1x128xf32>
    %cst_17 = arith.constant dense<0.000000e+00> : vector<1x128xf32>
    %61 = tpu.matmul %59, %1, %cst_17 {dimension_numbers = #tpu.dot_dimension_numbers<[1], [0], [0], [1], [0, 0, 1, 1], [], []>} : vector<1x32xf32>, vector<32x128xf32>, vector<1x128xf32> -> vector<1x128xf32>
    %62 = arith.addf %60, %61 : vector<1x128xf32>
    %63 = arith.negf %62 : vector<1x128xf32>
    %64 = math.exp %63 : vector<1x128xf32>
    %cst_18 = arith.constant 1.000000e+00 : f32
    %65 = vector.broadcast %cst_18 : f32 to vector<1x128xf32>
    %66 = arith.addf %65, %64 : vector<1x128xf32>
    %67 = arith.divf %65, %66 : vector<1x128xf32>
    %68 = vector.extract_strided_slice %67 {offsets = [0, 0], sizes = [1, 32], strides = [1, 1]} : vector<1x128xf32> to vector<1x32xf32>
    %69 = vector.extract_strided_slice %67 {offsets = [0, 32], sizes = [1, 32], strides = [1, 1]} : vector<1x128xf32> to vector<1x32xf32>
    %70 = vector.extract_strided_slice %67 {offsets = [0, 64], sizes = [1, 32], strides = [1, 1]} : vector<1x128xf32> to vector<1x32xf32>
    %71 = vector.extract_strided_slice %67 {offsets = [0, 96], sizes = [1, 32], strides = [1, 1]} : vector<1x128xf32> to vector<1x32xf32>
    %cst_19 = arith.constant 2.000000e+00 : f32
    %72 = vector.broadcast %cst_19 : f32 to vector<1x32xf32>
    %73 = arith.mulf %72, %71 : vector<1x32xf32>
    %cst_20 = arith.constant 1.000000e+00 : f32
    %74 = vector.broadcast %cst_20 : f32 to vector<1x32xf32>
    %75 = arith.subf %73, %74 : vector<1x32xf32>
    %76 = arith.mulf %69, %57 : vector<1x32xf32>
    %77 = arith.mulf %68, %75 : vector<1x32xf32>
    %78 = arith.addf %76, %77 : vector<1x32xf32>
    %79 = math.tanh %78 : vector<1x32xf32>
    %80 = arith.mulf %70, %79 : vector<1x32xf32>
    %81 = vector.extract_strided_slice %15 {offsets = [3, 0], sizes = [1, 128], strides = [1, 1]} : vector<8x128xf32> to vector<1x128xf32>
    %cst_21 = arith.constant dense<0.000000e+00> : vector<1x128xf32>
    %82 = tpu.matmul %80, %1, %cst_21 {dimension_numbers = #tpu.dot_dimension_numbers<[1], [0], [0], [1], [0, 0, 1, 1], [], []>} : vector<1x32xf32>, vector<32x128xf32>, vector<1x128xf32> -> vector<1x128xf32>
    %83 = arith.addf %81, %82 : vector<1x128xf32>
    %84 = arith.negf %83 : vector<1x128xf32>
    %85 = math.exp %84 : vector<1x128xf32>
    %cst_22 = arith.constant 1.000000e+00 : f32
    %86 = vector.broadcast %cst_22 : f32 to vector<1x128xf32>
    %87 = arith.addf %86, %85 : vector<1x128xf32>
    %88 = arith.divf %86, %87 : vector<1x128xf32>
    %89 = vector.extract_strided_slice %88 {offsets = [0, 0], sizes = [1, 32], strides = [1, 1]} : vector<1x128xf32> to vector<1x32xf32>
    %90 = vector.extract_strided_slice %88 {offsets = [0, 32], sizes = [1, 32], strides = [1, 1]} : vector<1x128xf32> to vector<1x32xf32>
    %91 = vector.extract_strided_slice %88 {offsets = [0, 64], sizes = [1, 32], strides = [1, 1]} : vector<1x128xf32> to vector<1x32xf32>
    %92 = vector.extract_strided_slice %88 {offsets = [0, 96], sizes = [1, 32], strides = [1, 1]} : vector<1x128xf32> to vector<1x32xf32>
    %cst_23 = arith.constant 2.000000e+00 : f32
    %93 = vector.broadcast %cst_23 : f32 to vector<1x32xf32>
    %94 = arith.mulf %93, %92 : vector<1x32xf32>
    %cst_24 = arith.constant 1.000000e+00 : f32
    %95 = vector.broadcast %cst_24 : f32 to vector<1x32xf32>
    %96 = arith.subf %94, %95 : vector<1x32xf32>
    %97 = arith.mulf %90, %78 : vector<1x32xf32>
    %98 = arith.mulf %89, %96 : vector<1x32xf32>
    %99 = arith.addf %97, %98 : vector<1x32xf32>
    %100 = math.tanh %99 : vector<1x32xf32>
    %101 = arith.mulf %91, %100 : vector<1x32xf32>
    %102 = vector.extract_strided_slice %15 {offsets = [4, 0], sizes = [1, 128], strides = [1, 1]} : vector<8x128xf32> to vector<1x128xf32>
    %cst_25 = arith.constant dense<0.000000e+00> : vector<1x128xf32>
    %103 = tpu.matmul %101, %1, %cst_25 {dimension_numbers = #tpu.dot_dimension_numbers<[1], [0], [0], [1], [0, 0, 1, 1], [], []>} : vector<1x32xf32>, vector<32x128xf32>, vector<1x128xf32> -> vector<1x128xf32>
    %104 = arith.addf %102, %103 : vector<1x128xf32>
    %105 = arith.negf %104 : vector<1x128xf32>
    %106 = math.exp %105 : vector<1x128xf32>
    %cst_26 = arith.constant 1.000000e+00 : f32
    %107 = vector.broadcast %cst_26 : f32 to vector<1x128xf32>
    %108 = arith.addf %107, %106 : vector<1x128xf32>
    %109 = arith.divf %107, %108 : vector<1x128xf32>
    %110 = vector.extract_strided_slice %109 {offsets = [0, 0], sizes = [1, 32], strides = [1, 1]} : vector<1x128xf32> to vector<1x32xf32>
    %111 = vector.extract_strided_slice %109 {offsets = [0, 32], sizes = [1, 32], strides = [1, 1]} : vector<1x128xf32> to vector<1x32xf32>
    %112 = vector.extract_strided_slice %109 {offsets = [0, 64], sizes = [1, 32], strides = [1, 1]} : vector<1x128xf32> to vector<1x32xf32>
    %113 = vector.extract_strided_slice %109 {offsets = [0, 96], sizes = [1, 32], strides = [1, 1]} : vector<1x128xf32> to vector<1x32xf32>
    %cst_27 = arith.constant 2.000000e+00 : f32
    %114 = vector.broadcast %cst_27 : f32 to vector<1x32xf32>
    %115 = arith.mulf %114, %113 : vector<1x32xf32>
    %cst_28 = arith.constant 1.000000e+00 : f32
    %116 = vector.broadcast %cst_28 : f32 to vector<1x32xf32>
    %117 = arith.subf %115, %116 : vector<1x32xf32>
    %118 = arith.mulf %111, %99 : vector<1x32xf32>
    %119 = arith.mulf %110, %117 : vector<1x32xf32>
    %120 = arith.addf %118, %119 : vector<1x32xf32>
    %121 = math.tanh %120 : vector<1x32xf32>
    %122 = arith.mulf %112, %121 : vector<1x32xf32>
    %123 = vector.extract_strided_slice %15 {offsets = [5, 0], sizes = [1, 128], strides = [1, 1]} : vector<8x128xf32> to vector<1x128xf32>
    %cst_29 = arith.constant dense<0.000000e+00> : vector<1x128xf32>
    %124 = tpu.matmul %122, %1, %cst_29 {dimension_numbers = #tpu.dot_dimension_numbers<[1], [0], [0], [1], [0, 0, 1, 1], [], []>} : vector<1x32xf32>, vector<32x128xf32>, vector<1x128xf32> -> vector<1x128xf32>
    %125 = arith.addf %123, %124 : vector<1x128xf32>
    %126 = arith.negf %125 : vector<1x128xf32>
    %127 = math.exp %126 : vector<1x128xf32>
    %cst_30 = arith.constant 1.000000e+00 : f32
    %128 = vector.broadcast %cst_30 : f32 to vector<1x128xf32>
    %129 = arith.addf %128, %127 : vector<1x128xf32>
    %130 = arith.divf %128, %129 : vector<1x128xf32>
    %131 = vector.extract_strided_slice %130 {offsets = [0, 0], sizes = [1, 32], strides = [1, 1]} : vector<1x128xf32> to vector<1x32xf32>
    %132 = vector.extract_strided_slice %130 {offsets = [0, 32], sizes = [1, 32], strides = [1, 1]} : vector<1x128xf32> to vector<1x32xf32>
    %133 = vector.extract_strided_slice %130 {offsets = [0, 64], sizes = [1, 32], strides = [1, 1]} : vector<1x128xf32> to vector<1x32xf32>
    %134 = vector.extract_strided_slice %130 {offsets = [0, 96], sizes = [1, 32], strides = [1, 1]} : vector<1x128xf32> to vector<1x32xf32>
    %cst_31 = arith.constant 2.000000e+00 : f32
    %135 = vector.broadcast %cst_31 : f32 to vector<1x32xf32>
    %136 = arith.mulf %135, %134 : vector<1x32xf32>
    %cst_32 = arith.constant 1.000000e+00 : f32
    %137 = vector.broadcast %cst_32 : f32 to vector<1x32xf32>
    %138 = arith.subf %136, %137 : vector<1x32xf32>
    %139 = arith.mulf %132, %120 : vector<1x32xf32>
    %140 = arith.mulf %131, %138 : vector<1x32xf32>
    %141 = arith.addf %139, %140 : vector<1x32xf32>
    %142 = math.tanh %141 : vector<1x32xf32>
    %143 = arith.mulf %133, %142 : vector<1x32xf32>
    %144 = vector.extract_strided_slice %15 {offsets = [6, 0], sizes = [1, 128], strides = [1, 1]} : vector<8x128xf32> to vector<1x128xf32>
    %cst_33 = arith.constant dense<0.000000e+00> : vector<1x128xf32>
    %145 = tpu.matmul %143, %1, %cst_33 {dimension_numbers = #tpu.dot_dimension_numbers<[1], [0], [0], [1], [0, 0, 1, 1], [], []>} : vector<1x32xf32>, vector<32x128xf32>, vector<1x128xf32> -> vector<1x128xf32>
    %146 = arith.addf %144, %145 : vector<1x128xf32>
    %147 = arith.negf %146 : vector<1x128xf32>
    %148 = math.exp %147 : vector<1x128xf32>
    %cst_34 = arith.constant 1.000000e+00 : f32
    %149 = vector.broadcast %cst_34 : f32 to vector<1x128xf32>
    %150 = arith.addf %149, %148 : vector<1x128xf32>
    %151 = arith.divf %149, %150 : vector<1x128xf32>
    %152 = vector.extract_strided_slice %151 {offsets = [0, 0], sizes = [1, 32], strides = [1, 1]} : vector<1x128xf32> to vector<1x32xf32>
    %153 = vector.extract_strided_slice %151 {offsets = [0, 32], sizes = [1, 32], strides = [1, 1]} : vector<1x128xf32> to vector<1x32xf32>
    %154 = vector.extract_strided_slice %151 {offsets = [0, 64], sizes = [1, 32], strides = [1, 1]} : vector<1x128xf32> to vector<1x32xf32>
    %155 = vector.extract_strided_slice %151 {offsets = [0, 96], sizes = [1, 32], strides = [1, 1]} : vector<1x128xf32> to vector<1x32xf32>
    %cst_35 = arith.constant 2.000000e+00 : f32
    %156 = vector.broadcast %cst_35 : f32 to vector<1x32xf32>
    %157 = arith.mulf %156, %155 : vector<1x32xf32>
    %cst_36 = arith.constant 1.000000e+00 : f32
    %158 = vector.broadcast %cst_36 : f32 to vector<1x32xf32>
    %159 = arith.subf %157, %158 : vector<1x32xf32>
    %160 = arith.mulf %153, %141 : vector<1x32xf32>
    %161 = arith.mulf %152, %159 : vector<1x32xf32>
    %162 = arith.addf %160, %161 : vector<1x32xf32>
    %163 = math.tanh %162 : vector<1x32xf32>
    %164 = arith.mulf %154, %163 : vector<1x32xf32>
    %165 = vector.extract_strided_slice %15 {offsets = [7, 0], sizes = [1, 128], strides = [1, 1]} : vector<8x128xf32> to vector<1x128xf32>
    %cst_37 = arith.constant dense<0.000000e+00> : vector<1x128xf32>
    %166 = tpu.matmul %164, %1, %cst_37 {dimension_numbers = #tpu.dot_dimension_numbers<[1], [0], [0], [1], [0, 0, 1, 1], [], []>} : vector<1x32xf32>, vector<32x128xf32>, vector<1x128xf32> -> vector<1x128xf32>
    %167 = arith.addf %165, %166 : vector<1x128xf32>
    %168 = arith.negf %167 : vector<1x128xf32>
    %169 = math.exp %168 : vector<1x128xf32>
    %cst_38 = arith.constant 1.000000e+00 : f32
    %170 = vector.broadcast %cst_38 : f32 to vector<1x128xf32>
    %171 = arith.addf %170, %169 : vector<1x128xf32>
    %172 = arith.divf %170, %171 : vector<1x128xf32>
    %173 = vector.extract_strided_slice %172 {offsets = [0, 0], sizes = [1, 32], strides = [1, 1]} : vector<1x128xf32> to vector<1x32xf32>
    %174 = vector.extract_strided_slice %172 {offsets = [0, 32], sizes = [1, 32], strides = [1, 1]} : vector<1x128xf32> to vector<1x32xf32>
    %175 = vector.extract_strided_slice %172 {offsets = [0, 64], sizes = [1, 32], strides = [1, 1]} : vector<1x128xf32> to vector<1x32xf32>
    %176 = vector.extract_strided_slice %172 {offsets = [0, 96], sizes = [1, 32], strides = [1, 1]} : vector<1x128xf32> to vector<1x32xf32>
    %cst_39 = arith.constant 2.000000e+00 : f32
    %177 = vector.broadcast %cst_39 : f32 to vector<1x32xf32>
    %178 = arith.mulf %177, %176 : vector<1x32xf32>
    %cst_40 = arith.constant 1.000000e+00 : f32
    %179 = vector.broadcast %cst_40 : f32 to vector<1x32xf32>
    %180 = arith.subf %178, %179 : vector<1x32xf32>
    %181 = arith.mulf %174, %162 : vector<1x32xf32>
    %182 = arith.mulf %173, %180 : vector<1x32xf32>
    %183 = arith.addf %181, %182 : vector<1x32xf32>
    %184 = math.tanh %183 : vector<1x32xf32>
    %185 = arith.mulf %175, %184 : vector<1x32xf32>
    %186 = arith.mulf %185, %4 : vector<1x32xf32>
    %cst_41 = arith.constant dense<0.000000e+00> : vector<1xf32>
    %187 = vector.multi_reduction <add>, %186, %cst_41 [1] : vector<1x32xf32> to vector<1xf32>
    %188 = vector.shape_cast %187 : vector<1xf32> to vector<1x1xf32>
    %189 = arith.addf %188, %5 : vector<1x1xf32>
    %190 = arith.negf %189 : vector<1x1xf32>
    %191 = math.exp %190 : vector<1x1xf32>
    %cst_42 = arith.constant 1.000000e+00 : f32
    %192 = vector.broadcast %cst_42 : f32 to vector<1x1xf32>
    %193 = arith.addf %192, %191 : vector<1x1xf32>
    %194 = arith.divf %192, %193 : vector<1x1xf32>
    %c0_43 = arith.constant 0 : index
    %c0_44 = arith.constant 0 : index
    %195 = vector.load %arg2[%c0_43, %c0_44] : memref<1x1xf32, #tpu.memory_space<vmem>>, vector<1x1xf32>
    tpu.vector_store %arg2[%c0_43, %c0_44], %194 {strides = array<i32>} : memref<1x1xf32, #tpu.memory_space<vmem>>, vector<1x1xf32>,
    return
  }
}

</mosaic_0001>

<llo_original>
// kernel: tpu_custom_call.1
$region0: #{tpu_custom_call.1}
  #allocation0 [shape = 'u32[]', space=smem, size = 0x4, offset = 0x4, fixed_abs, tag = 'smem constant byte address 0x4 - core index']
  #allocation1 [shape = 'u32[144,128]{1,0:T(1,128)}', space=vmem, size = 0x12000, scoped, tag = 'internal scratch']
  %s0 = inlined_call_operand.vmem [shape: s32[8,1], index: 0, kind: input, shape index: {}]
  %s1 = inlined_call_operand.hbm [shape: f32[48,128], index: 1, kind: input, shape index: {}]
  %s2 = inlined_call_operand.hbm [shape: f32[1,1], index: 2, kind: output, shape index: {}]
  %s3 = sld [smem:[#allocation0]]
  $region22: #{tpu_custom_call.1} parent=0
    _
  %s5 = ssub.s32 1, %s3
  %s6 = scalar_select 0, %s5, %s3
  $region1: #{tpu_custom_call.1} parent=0
    #allocation2 [shape = 'u8[24576]{0}', space=vmem, size = 0x6000, scoped, tag = 'input window, operand 1, single buffered']
    #allocation3 [shape = 's32[1]{0}', space=sflag, size = 0x4, scoped, tag = 'scoped memory for tpu_custom_call.1']
    #allocation4 [shape = 's32[1]{0}', space=sflag, size = 0x4, scoped, tag = 'scoped memory for tpu_custom_call.1']
    #allocation5 [shape = 'u8[512]{0}', space=vmem, size = 0x400, scoped, tag = 'output window, operand 0, single buffered']
    %7 = vsyncpa [#allocation3], 0
    %8 = vsyncpa [#allocation4], 0
    // Predicated region
    $region2: #{tpu_custom_call.1} parent=1 // pred_check
      _
    $region3: #{tpu_custom_call.1} parent=1 // pred_check_branch
      %10 = sbr.rel (0) target = $region5
    $region4: #{tpu_custom_call.1} parent=1 // pred_region
      _
    $region5: #{tpu_custom_call.1} parent=1 // pred_fallthru
      _
    // Predicated region
    $region6: #{tpu_custom_call.1} parent=1 // pred_check
      _
    $region7: #{tpu_custom_call.1} parent=1 // pred_check_branch
      %12 = sbr.rel (0) target = $region9
    $region8: #{tpu_custom_call.1} parent=1 // pred_region
      %s14 = ssub.s32 768, 768
      %15 = vsyncadd [#allocation3], %s14
      %s16 = sshll.u32 [#allocation2], 4
      %s17 = int_to_ptr.vmem [resolvable:$true] %s16
      %22 = dma.hbm_to_vmem [thread:$0]  %s1, 768, %s17, [#allocation3], 128, 128, 8
    $region9: #{tpu_custom_call.1} parent=1 // pred_fallthru
      _
    // Predicated region
    $region10: #{tpu_custom_call.1} parent=1 // pred_check
      _
    $region11: #{tpu_custom_call.1} parent=1 // pred_check_branch
      %24 = sbr.rel (0) target = $region13
    $region12: #{tpu_custom_call.1} parent=1 // pred_region
      %25 = dma.done [#allocation3], 768
    $region13: #{tpu_custom_call.1} parent=1 // pred_fallthru
      _
    %v26 = vld [vmem:[#allocation2] sm:$0xff]
    %v27 = vld [vmem:[#allocation2 + $0x8] sm:$0xff]
    %v28 = vld [vmem:[#allocation2 + $0x10] sm:$0xff]
    %v29 = vld [vmem:[#allocation2 + $0x18] sm:$0xff]
    %v30 = vld [vmem:[#allocation2 + $0x20] sm:$0xff]
    %v31 = vld [vmem:[#allocation2 + $0x28] sm:$0xff]
    %v32 = vld [vmem:[%s0] sm:$0xff]
    %v33 = vlaneseq
    %v34 = vand.u32 %v33, 127
    %35 = vset.pattern.permute.xlu0 0
    %36 = vperm.xlu0 %35, %v32
    %v37 = vpop.permute.xlu0 %36
    %vm38 = vcmp.eq.s32.totalorder %v37, %v34
    %v39 = vsel %vm38, 1.0, 0.0
    %v40 = vlaneseq
    %v41 = vshrl.u32 %v40, 7
    %v42 = vsub.s32 0, %v41
    %v43 = vrot.slane %v31, %v42
    %vm44 = vcmask 64512
    %v46 = vsel %vm44, %v39, 0
    %48 = vmatprep.subr.mxu0 0.0
    %49 = vmatpush1.msra.mxu0 %v26
    %50 = vmatprep.subr.mxu0 0.0
    %51 = vmatpush1.msra.mxu0 0.0
    %52 = vmatprep.subr.mxu0 0.0
    %53 = vmatpush1.msra.mxu0 0.0
    %54 = vmatprep.subr.mxu0 0.0
    %55 = vmatpush1.msra.mxu0 0.0
    %56 = vmatprep.subr.mxu0 0.0
    %57 = vmatpush1.msra.mxu0 0.0
    %58 = vmatprep.subr.mxu0 0.0
    %59 = vmatpush1.msra.mxu0 0.0
    %60 = vmatprep.subr.mxu0 0.0
    %61 = vmatpush1.msra.mxu0 0.0
    %62 = vmatprep.subr.mxu0 0.0
    %63 = vmatpush1.msra.mxu0 0.0
    %64 = vmatprep.subr.mxu0 0.0
    %65 = vmatpush1.msra.mxu0 0.0
    %66 = vmatprep.subr.mxu0 0.0
    %67 = vmatpush1.msra.mxu0 0.0
    %68 = vmatprep.subr.mxu0 0.0
    %69 = vmatpush1.msra.mxu0 0.0
    %70 = vmatprep.subr.mxu0 0.0
    %71 = vmatpush1.msra.mxu0 0.0
    %72 = vmatprep.subr.mxu0 0.0
    %73 = vmatpush1.msra.mxu0 0.0
    %74 = vmatprep.subr.mxu0 0.0
    %75 = vmatpush1.msra.mxu0 0.0
    %76 = vmatprep.subr.mxu0 0.0
    %77 = vmatpush1.msra.mxu0 0.0
    %78 = vmatprep.subr.mxu0 0.0
    %79 = vmatpush1.msra.mxu0 0.0
    %80 = vmatprep.subr.mxu0 0.0
    %81 = vmatpush1.msra.mxu0 0.0
    %82 = vmatprep.subr.mxu0 0.0
    %83 = vmatpush1.msra.mxu0 0.0
    %84 = vmatprep.subr.mxu0 0.0
    %85 = vmatpush1.msra.mxu0 0.0
    %86 = vmatprep.subr.mxu0 0.0
    %87 = vmatpush1.msra.mxu0 0.0
    %88 = vmatprep.subr.mxu0 0.0
    %89 = vmatpush1.msra.mxu0 0.0
    %90 = vmatprep.subr.mxu0 0.0
    %91 = vmatpush1.msra.mxu0 0.0
    %92 = vmatprep.subr.mxu0 0.0
    %93 = vmatpush1.msra.mxu0 0.0
    %94 = vmatprep.subr.mxu0 0.0
    %95 = vmatpush1.msra.mxu0 0.0
    %96 = vmatprep.subr.mxu0 0.0
    %97 = vmatpush1.msra.mxu0 0.0
    %98 = vmatprep.subr.mxu0 0.0
    %99 = vmatpush1.msra.mxu0 0.0
    %100 = vmatprep.subr.mxu0 0.0
    %101 = vmatpush1.msra.mxu0 0.0
    %102 = vmatprep.subr.mxu0 0.0
    %103 = vmatpush1.msra.mxu0 0.0
    %104 = vmatprep.subr.mxu0 0.0
    %105 = vmatpush1.msra.mxu0 0.0
    %106 = vmatprep.subr.mxu0 0.0
    %107 = vmatpush1.msra.mxu0 0.0
    %108 = vmatprep.subr.mxu0 0.0
    %109 = vmatpush1.msra.mxu0 0.0
    %110 = vmatprep.subr.mxu0 0.0
    %111 = vmatpush1.msra.mxu0 0.0
    %112 = vmatprep.mubr.f32.mxu0 0.0
    %113 = vmatmul.mubr.f32.gmra.mrb[0].mxu0 %v46
    %v114 = vpop.f32.mrb[0].mxu0
    %v115 = vadd.f32 %v43, %v114
    %v116 = vpop.f32.mrb[0].mxu0
    %117 = vdwg.mxu0
    %vm118 = vcmask 261120
    %v120 = vsel %vm118, 0.0, 0
    %122 = vmatprep.subr.mxu0 0.0
    %123 = vmatpush1.msra.mxu0 %v27
    %124 = vmatprep.subr.mxu0 0.0
    %125 = vmatpush1.msra.mxu0 %v28
    %126 = vmatprep.subr.mxu0 0.0
    %127 = vmatpush1.msra.mxu0 %v29
    %128 = vmatprep.subr.mxu0 0.0
    %129 = vmatpush1.msra.mxu0 %v30
    %130 = vmatprep.subr.mxu0 0.0
    %131 = vmatpush1.msra.mxu0 0.0
    %132 = vmatprep.subr.mxu0 0.0
    %133 = vmatpush1.msra.mxu0 0.0
    %134 = vmatprep.subr.mxu0 0.0
    %135 = vmatpush1.msra.mxu0 0.0
    %136 = vmatprep.subr.mxu0 0.0
    %137 = vmatpush1.msra.mxu0 0.0
    %138 = vmatprep.subr.mxu0 0.0
    %139 = vmatpush1.msra.mxu0 0.0
    %140 = vmatprep.subr.mxu0 0.0
    %141 = vmatpush1.msra.mxu0 0.0
    %142 = vmatprep.subr.mxu0 0.0
    %143 = vmatpush1.msra.mxu0 0.0
    %144 = vmatprep.subr.mxu0 0.0
    %145 = vmatpush1.msra.mxu0 0.0
    %146 = vmatprep.subr.mxu0 0.0
    %147 = vmatpush1.msra.mxu0 0.0
    %148 = vmatprep.subr.mxu0 0.0
    %149 = vmatpush1.msra.mxu0 0.0
    %150 = vmatprep.subr.mxu0 0.0
    %151 = vmatpush1.msra.mxu0 0.0
    %152 = vmatprep.subr.mxu0 0.0
    %153 = vmatpush1.msra.mxu0 0.0
    %154 = vmatprep.subr.mxu0 0.0
    %155 = vmatpush1.msra.mxu0 0.0
    %156 = vmatprep.subr.mxu0 0.0
    %157 = vmatpush1.msra.mxu0 0.0
    %158 = vmatprep.subr.mxu0 0.0
    %159 = vmatpush1.msra.mxu0 0.0
    %160 = vmatprep.subr.mxu0 0.0
    %161 = vmatpush1.msra.mxu0 0.0
    %162 = vmatprep.subr.mxu0 0.0
    %163 = vmatpush1.msra.mxu0 0.0
    %164 = vmatprep.subr.mxu0 0.0
    %165 = vmatpush1.msra.mxu0 0.0
    %166 = vmatprep.subr.mxu0 0.0
    %167 = vmatpush1.msra.mxu0 0.0
    %168 = vmatprep.subr.mxu0 0.0
    %169 = vmatpush1.msra.mxu0 0.0
    %170 = vmatprep.subr.mxu0 0.0
    %171 = vmatpush1.msra.mxu0 0.0
    %172 = vmatprep.subr.mxu0 0.0
    %173 = vmatpush1.msra.mxu0 0.0
    %174 = vmatprep.subr.mxu0 0.0
    %175 = vmatpush1.msra.mxu0 0.0
    %176 = vmatprep.subr.mxu0 0.0
    %177 = vmatpush1.msra.mxu0 0.0
    %178 = vmatprep.subr.mxu0 0.0
    %179 = vmatpush1.msra.mxu0 0.0
    %180 = vmatprep.subr.mxu0 0.0
    %181 = vmatpush1.msra.mxu0 0.0
    %182 = vmatprep.subr.mxu0 0.0
    %183 = vmatpush1.msra.mxu0 0.0
    %184 = vmatprep.subr.mxu0 0.0
    %185 = vmatpush1.msra.mxu0 0.0
    %186 = vmatprep.mubr.f32.mxu0 0.0
    %187 = vmatmul.mubr.f32.gmra.mrb[0].mxu0 %v120
    %v188 = vpop.f32.mrb[0].mxu0
    %v189 = vadd.f32 0.0, %v188
    %v190 = vpop.f32.mrb[0].mxu0
    %191 = vdwg.mxu0
    %v192 = vadd.f32 %v115, %v189
    %v193 = vxor.u32 %v192, 2147483648
    %v194 = vmul.f32 %v193, 1.442695
    %v195 = vpow.pop %v194
    %v196 = vadd.f32 %v195, 1.0
    %v197 = vrcp.pop %v196
    %v198 = vmul.f32 1.0, %v197
    %v199 = vmul.f32 %v198, 2.0
    %v200 = vsub.f32 %v199, 1.0
    %v201 = vmul.f32 %v198, 0.0
    %203 = vrot.lane.b32.xlu0 %v200, 32
    %v204 = vpop.permute.xlu0 %203
    %v206 = vmul.f32 %v198, %v204
    %208 = vrot.lane.b32.xlu0 %v206, 32
    %v209 = vpop.permute.xlu0 %208
    %v211 = vadd.f32 %v201, %v209
    %v212 = vtanh.pop %v211
    %214 = vrot.lane.b32.xlu0 %v212, 32
    %v215 = vpop.permute.xlu0 %214
    %v217 = vmul.f32 %v198, %v215
    %219 = vrot.lane.b32.xlu0 %v217, 64
    %v220 = vpop.permute.xlu0 %219
    %v221 = vsel %vm118, %v220, 0
    %223 = vmatprep.subr.mxu0 0.0
    %224 = vmatpush1.msra.mxu0 %v27
    %225 = vmatprep.subr.mxu0 0.0
    %226 = vmatpush1.msra.mxu0 %v28
    %227 = vmatprep.subr.mxu0 0.0
    %228 = vmatpush1.msra.mxu0 %v29
    %229 = vmatprep.subr.mxu0 0.0
    %230 = vmatpush1.msra.mxu0 %v30
    %231 = vmatprep.subr.mxu0 0.0
    %232 = vmatpush1.msra.mxu0 0.0
    %233 = vmatprep.subr.mxu0 0.0
    %234 = vmatpush1.msra.mxu0 0.0
    %235 = vmatprep.subr.mxu0 0.0
    %236 = vmatpush1.msra.mxu0 0.0
    %237 = vmatprep.subr.mxu0 0.0
    %238 = vmatpush1.msra.mxu0 0.0
    %239 = vmatprep.subr.mxu0 0.0
    %240 = vmatpush1.msra.mxu0 0.0
    %241 = vmatprep.subr.mxu0 0.0
    %242 = vmatpush1.msra.mxu0 0.0
    %243 = vmatprep.subr.mxu0 0.0
    %244 = vmatpush1.msra.mxu0 0.0
    %245 = vmatprep.subr.mxu0 0.0
    %246 = vmatpush1.msra.mxu0 0.0
    %247 = vmatprep.subr.mxu0 0.0
    %248 = vmatpush1.msra.mxu0 0.0
    %249 = vmatprep.subr.mxu0 0.0
    %250 = vmatpush1.msra.mxu0 0.0
    %251 = vmatprep.subr.mxu0 0.0
    %252 = vmatpush1.msra.mxu0 0.0
    %253 = vmatprep.subr.mxu0 0.0
    %254 = vmatpush1.msra.mxu0 0.0
    %255 = vmatprep.subr.mxu0 0.0
    %256 = vmatpush1.msra.mxu0 0.0
    %257 = vmatprep.subr.mxu0 0.0
    %258 = vmatpush1.msra.mxu0 0.0
    %259 = vmatprep.subr.mxu0 0.0
    %260 = vmatpush1.msra.mxu0 0.0
    %261 = vmatprep.subr.mxu0 0.0
    %262 = vmatpush1.msra.mxu0 0.0
    %263 = vmatprep.subr.mxu0 0.0
    %264 = vmatpush1.msra.mxu0 0.0
    %265 = vmatprep.subr.mxu0 0.0
    %266 = vmatpush1.msra.mxu0 0.0
    %267 = vmatprep.subr.mxu0 0.0
    %268 = vmatpush1.msra.mxu0 0.0
    %269 = vmatprep.subr.mxu0 0.0
    %270 = vmatpush1.msra.mxu0 0.0
    %271 = vmatprep.subr.mxu0 0.0
    %272 = vmatpush1.msra.mxu0 0.0
    %273 = vmatprep.subr.mxu0 0.0
    %274 = vmatpush1.msra.mxu0 0.0
    %275 = vmatprep.subr.mxu0 0.0
    %276 = vmatpush1.msra.mxu0 0.0
    %277 = vmatprep.subr.mxu0 0.0
    %278 = vmatpush1.msra.mxu0 0.0
    %279 = vmatprep.subr.mxu0 0.0
    %280 = vmatpush1.msra.mxu0 0.0
    %281 = vmatprep.subr.mxu0 0.0
    %282 = vmatpush1.msra.mxu0 0.0
    %283 = vmatprep.subr.mxu0 0.0
    %284 = vmatpush1.msra.mxu0 0.0
    %285 = vmatprep.subr.mxu0 0.0
    %286 = vmatpush1.msra.mxu0 0.0
    %287 = vmatprep.mubr.f32.mxu0 0.0
    %288 = vmatmul.mubr.f32.gmra.mrb[0].mxu0 %v221
    %v289 = vpop.f32.mrb[0].mxu0
    %v290 = vadd.f32 0.0, %v289
    %v291 = vpop.f32.mrb[0].mxu0
    %292 = vdwg.mxu0
    %v294 = vrot.slane %v290, 7
    %v296 = vadd.f32 %v115, %v294
    %v297 = vxor.u32 %v296, 2147483648
    %v298 = vmul.f32 %v297, 1.442695
    %v299 = vpow.pop %v298
    %v300 = vadd.f32 %v299, 1.0
    %v301 = vrcp.pop %v300
    %v302 = vmul.f32 1.0, %v301
    %v303 = vmul.f32 %v302, 2.0
    %v304 = vsub.f32 %v303, 1.0
    %v306 = vrot.slane %v211, 7
    %v308 = vmul.f32 %v302, %v306
    %310 = vrot.lane.b32.xlu0 %v304, 32
    %v311 = vpop.permute.xlu0 %310
    %v313 = vmul.f32 %v302, %v311
    %315 = vrot.lane.b32.xlu0 %v313, 32
    %v316 = vpop.permute.xlu0 %315
    %v318 = vadd.f32 %v308, %v316
    %v319 = vtanh.pop %v318
    %321 = vrot.lane.b32.xlu0 %v319, 32
    %v322 = vpop.permute.xlu0 %321
    %v324 = vmul.f32 %v302, %v322
    %v326 = vrot.slane %v324, 1
    %327 = vrot.lane.b32.xlu0 %v326, 64
    %v328 = vpop.permute.xlu0 %327
    %v329 = vsel %vm118, %v328, 0
    %331 = vmatprep.subr.mxu0 0.0
    %332 = vmatpush1.msra.mxu0 %v27
    %333 = vmatprep.subr.mxu0 0.0
    %334 = vmatpush1.msra.mxu0 %v28
    %335 = vmatprep.subr.mxu0 0.0
    %336 = vmatpush1.msra.mxu0 %v29
    %337 = vmatprep.subr.mxu0 0.0
    %338 = vmatpush1.msra.mxu0 %v30
    %339 = vmatprep.subr.mxu0 0.0
    %340 = vmatpush1.msra.mxu0 0.0
    %341 = vmatprep.subr.mxu0 0.0
    %342 = vmatpush1.msra.mxu0 0.0
    %343 = vmatprep.subr.mxu0 0.0
    %344 = vmatpush1.msra.mxu0 0.0
    %345 = vmatprep.subr.mxu0 0.0
    %346 = vmatpush1.msra.mxu0 0.0
    %347 = vmatprep.subr.mxu0 0.0
    %348 = vmatpush1.msra.mxu0 0.0
    %349 = vmatprep.subr.mxu0 0.0
    %350 = vmatpush1.msra.mxu0 0.0
    %351 = vmatprep.subr.mxu0 0.0
    %352 = vmatpush1.msra.mxu0 0.0
    %353 = vmatprep.subr.mxu0 0.0
    %354 = vmatpush1.msra.mxu0 0.0
    %355 = vmatprep.subr.mxu0 0.0
    %356 = vmatpush1.msra.mxu0 0.0
    %357 = vmatprep.subr.mxu0 0.0
    %358 = vmatpush1.msra.mxu0 0.0
    %359 = vmatprep.subr.mxu0 0.0
    %360 = vmatpush1.msra.mxu0 0.0
    %361 = vmatprep.subr.mxu0 0.0
    %362 = vmatpush1.msra.mxu0 0.0
    %363 = vmatprep.subr.mxu0 0.0
    %364 = vmatpush1.msra.mxu0 0.0
    %365 = vmatprep.subr.mxu0 0.0
    %366 = vmatpush1.msra.mxu0 0.0
    %367 = vmatprep.subr.mxu0 0.0
    %368 = vmatpush1.msra.mxu0 0.0
    %369 = vmatprep.subr.mxu0 0.0
    %370 = vmatpush1.msra.mxu0 0.0
    %371 = vmatprep.subr.mxu0 0.0
    %372 = vmatpush1.msra.mxu0 0.0
    %373 = vmatprep.subr.mxu0 0.0
    %374 = vmatpush1.msra.mxu0 0.0
    %375 = vmatprep.subr.mxu0 0.0
    %376 = vmatpush1.msra.mxu0 0.0
    %377 = vmatprep.subr.mxu0 0.0
    %378 = vmatpush1.msra.mxu0 0.0
    %379 = vmatprep.subr.mxu0 0.0
    %380 = vmatpush1.msra.mxu0 0.0
    %381 = vmatprep.subr.mxu0 0.0
    %382 = vmatpush1.msra.mxu0 0.0
    %383 = vmatprep.subr.mxu0 0.0
    %384 = vmatpush1.msra.mxu0 0.0
    %385 = vmatprep.subr.mxu0 0.0
    %386 = vmatpush1.msra.mxu0 0.0
    %387 = vmatprep.subr.mxu0 0.0
    %388 = vmatpush1.msra.mxu0 0.0
    %389 = vmatprep.subr.mxu0 0.0
    %390 = vmatpush1.msra.mxu0 0.0
    %391 = vmatprep.subr.mxu0 0.0
    %392 = vmatpush1.msra.mxu0 0.0
    %393 = vmatprep.subr.mxu0 0.0
    %394 = vmatpush1.msra.mxu0 0.0
    %395 = vmatprep.mubr.f32.mxu0 0.0
    %396 = vmatmul.mubr.f32.gmra.mrb[0].mxu0 %v329
    %v397 = vpop.f32.mrb[0].mxu0
    %v398 = vadd.f32 0.0, %v397
    %v399 = vpop.f32.mrb[0].mxu0
    %400 = vdwg.mxu0
    %v402 = vrot.slane %v398, 6
    %v404 = vadd.f32 %v115, %v402
    %v405 = vxor.u32 %v404, 2147483648
    %v406 = vmul.f32 %v405, 1.442695
    %v407 = vpow.pop %v406
    %v408 = vadd.f32 %v407, 1.0
    %v409 = vrcp.pop %v408
    %v410 = vmul.f32 1.0, %v409
    %v411 = vmul.f32 %v410, 2.0
    %v412 = vsub.f32 %v411, 1.0
    %v414 = vrot.slane %v318, 7
    %v416 = vmul.f32 %v410, %v414
    %418 = vrot.lane.b32.xlu0 %v412, 32
    %v419 = vpop.permute.xlu0 %418
    %v421 = vmul.f32 %v410, %v419
    %423 = vrot.lane.b32.xlu0 %v421, 32
    %v424 = vpop.permute.xlu0 %423
    %v426 = vadd.f32 %v416, %v424
    %v427 = vtanh.pop %v426
    %429 = vrot.lane.b32.xlu0 %v427, 32
    %v430 = vpop.permute.xlu0 %429
    %v432 = vmul.f32 %v410, %v430
    %v434 = vrot.slane %v432, 2
    %435 = vrot.lane.b32.xlu0 %v434, 64
    %v436 = vpop.permute.xlu0 %435
    %v437 = vsel %vm118, %v436, 0
    %439 = vmatprep.subr.mxu0 0.0
    %440 = vmatpush1.msra.mxu0 %v27
    %441 = vmatprep.subr.mxu0 0.0
    %442 = vmatpush1.msra.mxu0 %v28
    %443 = vmatprep.subr.mxu0 0.0
    %444 = vmatpush1.msra.mxu0 %v29
    %445 = vmatprep.subr.mxu0 0.0
    %446 = vmatpush1.msra.mxu0 %v30
    %447 = vmatprep.subr.mxu0 0.0
    %448 = vmatpush1.msra.mxu0 0.0
    %449 = vmatprep.subr.mxu0 0.0
    %450 = vmatpush1.msra.mxu0 0.0
    %451 = vmatprep.subr.mxu0 0.0
    %452 = vmatpush1.msra.mxu0 0.0
    %453 = vmatprep.subr.mxu0 0.0
    %454 = vmatpush1.msra.mxu0 0.0
    %455 = vmatprep.subr.mxu0 0.0
    %456 = vmatpush1.msra.mxu0 0.0
    %457 = vmatprep.subr.mxu0 0.0
    %458 = vmatpush1.msra.mxu0 0.0
    %459 = vmatprep.subr.mxu0 0.0
    %460 = vmatpush1.msra.mxu0 0.0
    %461 = vmatprep.subr.mxu0 0.0
    %462 = vmatpush1.msra.mxu0 0.0
    %463 = vmatprep.subr.mxu0 0.0
    %464 = vmatpush1.msra.mxu0 0.0
    %465 = vmatprep.subr.mxu0 0.0
    %466 = vmatpush1.msra.mxu0 0.0
    %467 = vmatprep.subr.mxu0 0.0
    %468 = vmatpush1.msra.mxu0 0.0
    %469 = vmatprep.subr.mxu0 0.0
    %470 = vmatpush1.msra.mxu0 0.0
    %471 = vmatprep.subr.mxu0 0.0
    %472 = vmatpush1.msra.mxu0 0.0
    %473 = vmatprep.subr.mxu0 0.0
    %474 = vmatpush1.msra.mxu0 0.0
    %475 = vmatprep.subr.mxu0 0.0
    %476 = vmatpush1.msra.mxu0 0.0
    %477 = vmatprep.subr.mxu0 0.0
    %478 = vmatpush1.msra.mxu0 0.0
    %479 = vmatprep.subr.mxu0 0.0
    %480 = vmatpush1.msra.mxu0 0.0
    %481 = vmatprep.subr.mxu0 0.0
    %482 = vmatpush1.msra.mxu0 0.0
    %483 = vmatprep.subr.mxu0 0.0
    %484 = vmatpush1.msra.mxu0 0.0
    %485 = vmatprep.subr.mxu0 0.0
    %486 = vmatpush1.msra.mxu0 0.0
    %487 = vmatprep.subr.mxu0 0.0
    %488 = vmatpush1.msra.mxu0 0.0
    %489 = vmatprep.subr.mxu0 0.0
    %490 = vmatpush1.msra.mxu0 0.0
    %491 = vmatprep.subr.mxu0 0.0
    %492 = vmatpush1.msra.mxu0 0.0
    %493 = vmatprep.subr.mxu0 0.0
    %494 = vmatpush1.msra.mxu0 0.0
    %495 = vmatprep.subr.mxu0 0.0
    %496 = vmatpush1.msra.mxu0 0.0
    %497 = vmatprep.subr.mxu0 0.0
    %498 = vmatpush1.msra.mxu0 0.0
    %499 = vmatprep.subr.mxu0 0.0
    %500 = vmatpush1.msra.mxu0 0.0
    %501 = vmatprep.subr.mxu0 0.0
    %502 = vmatpush1.msra.mxu0 0.0
    %503 = vmatprep.mubr.f32.mxu0 0.0
    %504 = vmatmul.mubr.f32.gmra.mrb[0].mxu0 %v437
    %v505 = vpop.f32.mrb[0].mxu0
    %v506 = vadd.f32 0.0, %v505
    %v507 = vpop.f32.mrb[0].mxu0
    %508 = vdwg.mxu0
    %v510 = vrot.slane %v506, 5
    %v512 = vadd.f32 %v115, %v510
    %v513 = vxor.u32 %v512, 2147483648
    %v514 = vmul.f32 %v513, 1.442695
    %v515 = vpow.pop %v514
    %v516 = vadd.f32 %v515, 1.0
    %v517 = vrcp.pop %v516
    %v518 = vmul.f32 1.0, %v517
    %v519 = vmul.f32 %v518, 2.0
    %v520 = vsub.f32 %v519, 1.0
    %v522 = vrot.slane %v426, 7
    %v524 = vmul.f32 %v518, %v522
    %526 = vrot.lane.b32.xlu0 %v520, 32
    %v527 = vpop.permute.xlu0 %526
    %v529 = vmul.f32 %v518, %v527
    %531 = vrot.lane.b32.xlu0 %v529, 32
    %v532 = vpop.permute.xlu0 %531
    %v534 = vadd.f32 %v524, %v532
    %v535 = vtanh.pop %v534
    %537 = vrot.lane.b32.xlu0 %v535, 32
    %v538 = vpop.permute.xlu0 %537
    %v540 = vmul.f32 %v518, %v538
    %v542 = vrot.slane %v540, 3
    %543 = vrot.lane.b32.xlu0 %v542, 64
    %v544 = vpop.permute.xlu0 %543
    %v545 = vsel %vm118, %v544, 0
    %547 = vmatprep.subr.mxu0 0.0
    %548 = vmatpush1.msra.mxu0 %v27
    %549 = vmatprep.subr.mxu0 0.0
    %550 = vmatpush1.msra.mxu0 %v28
    %551 = vmatprep.subr.mxu0 0.0
    %552 = vmatpush1.msra.mxu0 %v29
    %553 = vmatprep.subr.mxu0 0.0
    %554 = vmatpush1.msra.mxu0 %v30
    %555 = vmatprep.subr.mxu0 0.0
    %556 = vmatpush1.msra.mxu0 0.0
    %557 = vmatprep.subr.mxu0 0.0
    %558 = vmatpush1.msra.mxu0 0.0
    %559 = vmatprep.subr.mxu0 0.0
    %560 = vmatpush1.msra.mxu0 0.0
    %561 = vmatprep.subr.mxu0 0.0
    %562 = vmatpush1.msra.mxu0 0.0
    %563 = vmatprep.subr.mxu0 0.0
    %564 = vmatpush1.msra.mxu0 0.0
    %565 = vmatprep.subr.mxu0 0.0
    %566 = vmatpush1.msra.mxu0 0.0
    %567 = vmatprep.subr.mxu0 0.0
    %568 = vmatpush1.msra.mxu0 0.0
    %569 = vmatprep.subr.mxu0 0.0
    %570 = vmatpush1.msra.mxu0 0.0
    %571 = vmatprep.subr.mxu0 0.0
    %572 = vmatpush1.msra.mxu0 0.0
    %573 = vmatprep.subr.mxu0 0.0
    %574 = vmatpush1.msra.mxu0 0.0
    %575 = vmatprep.subr.mxu0 0.0
    %576 = vmatpush1.msra.mxu0 0.0
    %577 = vmatprep.subr.mxu0 0.0
    %578 = vmatpush1.msra.mxu0 0.0
    %579 = vmatprep.subr.mxu0 0.0
    %580 = vmatpush1.msra.mxu0 0.0
    %581 = vmatprep.subr.mxu0 0.0
    %582 = vmatpush1.msra.mxu0 0.0
    %583 = vmatprep.subr.mxu0 0.0
    %584 = vmatpush1.msra.mxu0 0.0
    %585 = vmatprep.subr.mxu0 0.0
    %586 = vmatpush1.msra.mxu0 0.0
    %587 = vmatprep.subr.mxu0 0.0
    %588 = vmatpush1.msra.mxu0 0.0
    %589 = vmatprep.subr.mxu0 0.0
    %590 = vmatpush1.msra.mxu0 0.0
    %591 = vmatprep.subr.mxu0 0.0
    %592 = vmatpush1.msra.mxu0 0.0
    %593 = vmatprep.subr.mxu0 0.0
    %594 = vmatpush1.msra.mxu0 0.0
    %595 = vmatprep.subr.mxu0 0.0
    %596 = vmatpush1.msra.mxu0 0.0
    %597 = vmatprep.subr.mxu0 0.0
    %598 = vmatpush1.msra.mxu0 0.0
    %599 = vmatprep.subr.mxu0 0.0
    %600 = vmatpush1.msra.mxu0 0.0
    %601 = vmatprep.subr.mxu0 0.0
    %602 = vmatpush1.msra.mxu0 0.0
    %603 = vmatprep.subr.mxu0 0.0
    %604 = vmatpush1.msra.mxu0 0.0
    %605 = vmatprep.subr.mxu0 0.0
    %606 = vmatpush1.msra.mxu0 0.0
    %607 = vmatprep.subr.mxu0 0.0
    %608 = vmatpush1.msra.mxu0 0.0
    %609 = vmatprep.subr.mxu0 0.0
    %610 = vmatpush1.msra.mxu0 0.0
    %611 = vmatprep.mubr.f32.mxu0 0.0
    %612 = vmatmul.mubr.f32.gmra.mrb[0].mxu0 %v545
    %v613 = vpop.f32.mrb[0].mxu0
    %v614 = vadd.f32 0.0, %v613
    %v615 = vpop.f32.mrb[0].mxu0
    %616 = vdwg.mxu0
    %v618 = vrot.slane %v614, 4
    %v620 = vadd.f32 %v115, %v618
    %v621 = vxor.u32 %v620, 2147483648
    %v622 = vmul.f32 %v621, 1.442695
    %v623 = vpow.pop %v622
    %v624 = vadd.f32 %v623, 1.0
    %v625 = vrcp.pop %v624
    %v626 = vmul.f32 1.0, %v625
    %v627 = vmul.f32 %v626, 2.0
    %v628 = vsub.f32 %v627, 1.0
    %v630 = vrot.slane %v534, 7
    %v632 = vmul.f32 %v626, %v630
    %634 = vrot.lane.b32.xlu0 %v628, 32
    %v635 = vpop.permute.xlu0 %634
    %v637 = vmul.f32 %v626, %v635
    %639 = vrot.lane.b32.xlu0 %v637, 32
    %v640 = vpop.permute.xlu0 %639
    %v642 = vadd.f32 %v632, %v640
    %v643 = vtanh.pop %v642
    %645 = vrot.lane.b32.xlu0 %v643, 32
    %v646 = vpop.permute.xlu0 %645
    %v648 = vmul.f32 %v626, %v646
    %v650 = vrot.slane %v648, 4
    %651 = vrot.lane.b32.xlu0 %v650, 64
    %v652 = vpop.permute.xlu0 %651
    %v653 = vsel %vm118, %v652, 0
    %655 = vmatprep.subr.mxu0 0.0
    %656 = vmatpush1.msra.mxu0 %v27
    %657 = vmatprep.subr.mxu0 0.0
    %658 = vmatpush1.msra.mxu0 %v28
    %659 = vmatprep.subr.mxu0 0.0
    %660 = vmatpush1.msra.mxu0 %v29
    %661 = vmatprep.subr.mxu0 0.0
    %662 = vmatpush1.msra.mxu0 %v30
    %663 = vmatprep.subr.mxu0 0.0
    %664 = vmatpush1.msra.mxu0 0.0
    %665 = vmatprep.subr.mxu0 0.0
    %666 = vmatpush1.msra.mxu0 0.0
    %667 = vmatprep.subr.mxu0 0.0
    %668 = vmatpush1.msra.mxu0 0.0
    %669 = vmatprep.subr.mxu0 0.0
    %670 = vmatpush1.msra.mxu0 0.0
    %671 = vmatprep.subr.mxu0 0.0
    %672 = vmatpush1.msra.mxu0 0.0
    %673 = vmatprep.subr.mxu0 0.0
    %674 = vmatpush1.msra.mxu0 0.0
    %675 = vmatprep.subr.mxu0 0.0
    %676 = vmatpush1.msra.mxu0 0.0
    %677 = vmatprep.subr.mxu0 0.0
    %678 = vmatpush1.msra.mxu0 0.0
    %679 = vmatprep.subr.mxu0 0.0
    %680 = vmatpush1.msra.mxu0 0.0
    %681 = vmatprep.subr.mxu0 0.0
    %682 = vmatpush1.msra.mxu0 0.0
    %683 = vmatprep.subr.mxu0 0.0
    %684 = vmatpush1.msra.mxu0 0.0
    %685 = vmatprep.subr.mxu0 0.0
    %686 = vmatpush1.msra.mxu0 0.0
    %687 = vmatprep.subr.mxu0 0.0
    %688 = vmatpush1.msra.mxu0 0.0
    %689 = vmatprep.subr.mxu0 0.0
    %690 = vmatpush1.msra.mxu0 0.0
    %691 = vmatprep.subr.mxu0 0.0
    %692 = vmatpush1.msra.mxu0 0.0
    %693 = vmatprep.subr.mxu0 0.0
    %694 = vmatpush1.msra.mxu0 0.0
    %695 = vmatprep.subr.mxu0 0.0
    %696 = vmatpush1.msra.mxu0 0.0
    %697 = vmatprep.subr.mxu0 0.0
    %698 = vmatpush1.msra.mxu0 0.0
    %699 = vmatprep.subr.mxu0 0.0
    %700 = vmatpush1.msra.mxu0 0.0
    %701 = vmatprep.subr.mxu0 0.0
    %702 = vmatpush1.msra.mxu0 0.0
    %703 = vmatprep.subr.mxu0 0.0
    %704 = vmatpush1.msra.mxu0 0.0
    %705 = vmatprep.subr.mxu0 0.0
    %706 = vmatpush1.msra.mxu0 0.0
    %707 = vmatprep.subr.mxu0 0.0
    %708 = vmatpush1.msra.mxu0 0.0
    %709 = vmatprep.subr.mxu0 0.0
    %710 = vmatpush1.msra.mxu0 0.0
    %711 = vmatprep.subr.mxu0 0.0
    %712 = vmatpush1.msra.mxu0 0.0
    %713 = vmatprep.subr.mxu0 0.0
    %714 = vmatpush1.msra.mxu0 0.0
    %715 = vmatprep.subr.mxu0 0.0
    %716 = vmatpush1.msra.mxu0 0.0
    %717 = vmatprep.subr.mxu0 0.0
    %718 = vmatpush1.msra.mxu0 0.0
    %719 = vmatprep.mubr.f32.mxu0 0.0
    %720 = vmatmul.mubr.f32.gmra.mrb[0].mxu0 %v653
    %v721 = vpop.f32.mrb[0].mxu0
    %v722 = vadd.f32 0.0, %v721
    %v723 = vpop.f32.mrb[0].mxu0
    %724 = vdwg.mxu0
    %v726 = vrot.slane %v722, 3
    %v728 = vadd.f32 %v115, %v726
    %v729 = vxor.u32 %v728, 2147483648
    %v730 = vmul.f32 %v729, 1.442695
    %v731 = vpow.pop %v730
    %v732 = vadd.f32 %v731, 1.0
    %v733 = vrcp.pop %v732
    %v734 = vmul.f32 1.0, %v733
    %v735 = vmul.f32 %v734, 2.0
    %v736 = vsub.f32 %v735, 1.0
    %v738 = vrot.slane %v642, 7
    %v740 = vmul.f32 %v734, %v738
    %742 = vrot.lane.b32.xlu0 %v736, 32
    %v743 = vpop.permute.xlu0 %742
    %v745 = vmul.f32 %v734, %v743
    %747 = vrot.lane.b32.xlu0 %v745, 32
    %v748 = vpop.permute.xlu0 %747
    %v750 = vadd.f32 %v740, %v748
    %v751 = vtanh.pop %v750
    %753 = vrot.lane.b32.xlu0 %v751, 32
    %v754 = vpop.permute.xlu0 %753
    %v756 = vmul.f32 %v734, %v754
    %v758 = vrot.slane %v756, 5
    %759 = vrot.lane.b32.xlu0 %v758, 64
    %v760 = vpop.permute.xlu0 %759
    %v761 = vsel %vm118, %v760, 0
    %763 = vmatprep.subr.mxu0 0.0
    %764 = vmatpush1.msra.mxu0 %v27
    %765 = vmatprep.subr.mxu0 0.0
    %766 = vmatpush1.msra.mxu0 %v28
    %767 = vmatprep.subr.mxu0 0.0
    %768 = vmatpush1.msra.mxu0 %v29
    %769 = vmatprep.subr.mxu0 0.0
    %770 = vmatpush1.msra.mxu0 %v30
    %771 = vmatprep.subr.mxu0 0.0
    %772 = vmatpush1.msra.mxu0 0.0
    %773 = vmatprep.subr.mxu0 0.0
    %774 = vmatpush1.msra.mxu0 0.0
    %775 = vmatprep.subr.mxu0 0.0
    %776 = vmatpush1.msra.mxu0 0.0
    %777 = vmatprep.subr.mxu0 0.0
    %778 = vmatpush1.msra.mxu0 0.0
    %779 = vmatprep.subr.mxu0 0.0
    %780 = vmatpush1.msra.mxu0 0.0
    %781 = vmatprep.subr.mxu0 0.0
    %782 = vmatpush1.msra.mxu0 0.0
    %783 = vmatprep.subr.mxu0 0.0
    %784 = vmatpush1.msra.mxu0 0.0
    %785 = vmatprep.subr.mxu0 0.0
    %786 = vmatpush1.msra.mxu0 0.0
    %787 = vmatprep.subr.mxu0 0.0
    %788 = vmatpush1.msra.mxu0 0.0
    %789 = vmatprep.subr.mxu0 0.0
    %790 = vmatpush1.msra.mxu0 0.0
    %791 = vmatprep.subr.mxu0 0.0
    %792 = vmatpush1.msra.mxu0 0.0
    %793 = vmatprep.subr.mxu0 0.0
    %794 = vmatpush1.msra.mxu0 0.0
    %795 = vmatprep.subr.mxu0 0.0
    %796 = vmatpush1.msra.mxu0 0.0
    %797 = vmatprep.subr.mxu0 0.0
    %798 = vmatpush1.msra.mxu0 0.0
    %799 = vmatprep.subr.mxu0 0.0
    %800 = vmatpush1.msra.mxu0 0.0
    %801 = vmatprep.subr.mxu0 0.0
    %802 = vmatpush1.msra.mxu0 0.0
    %803 = vmatprep.subr.mxu0 0.0
    %804 = vmatpush1.msra.mxu0 0.0
    %805 = vmatprep.subr.mxu0 0.0
    %806 = vmatpush1.msra.mxu0 0.0
    %807 = vmatprep.subr.mxu0 0.0
    %808 = vmatpush1.msra.mxu0 0.0
    %809 = vmatprep.subr.mxu0 0.0
    %810 = vmatpush1.msra.mxu0 0.0
    %811 = vmatprep.subr.mxu0 0.0
    %812 = vmatpush1.msra.mxu0 0.0
    %813 = vmatprep.subr.mxu0 0.0
    %814 = vmatpush1.msra.mxu0 0.0
    %815 = vmatprep.subr.mxu0 0.0
    %816 = vmatpush1.msra.mxu0 0.0
    %817 = vmatprep.subr.mxu0 0.0
    %818 = vmatpush1.msra.mxu0 0.0
    %819 = vmatprep.subr.mxu0 0.0
    %820 = vmatpush1.msra.mxu0 0.0
    %821 = vmatprep.subr.mxu0 0.0
    %822 = vmatpush1.msra.mxu0 0.0
    %823 = vmatprep.subr.mxu0 0.0
    %824 = vmatpush1.msra.mxu0 0.0
    %825 = vmatprep.subr.mxu0 0.0
    %826 = vmatpush1.msra.mxu0 0.0
    %827 = vmatprep.mubr.f32.mxu0 0.0
    %828 = vmatmul.mubr.f32.gmra.mrb[0].mxu0 %v761
    %v829 = vpop.f32.mrb[0].mxu0
    %v830 = vadd.f32 0.0, %v829
    %v831 = vpop.f32.mrb[0].mxu0
    %832 = vdwg.mxu0
    %v834 = vrot.slane %v830, 2
    %v836 = vadd.f32 %v115, %v834
    %v837 = vxor.u32 %v836, 2147483648
    %v838 = vmul.f32 %v837, 1.442695
    %v839 = vpow.pop %v838
    %v840 = vadd.f32 %v839, 1.0
    %v841 = vrcp.pop %v840
    %v842 = vmul.f32 1.0, %v841
    %v843 = vmul.f32 %v842, 2.0
    %v844 = vsub.f32 %v843, 1.0
    %v846 = vrot.slane %v750, 7
    %v848 = vmul.f32 %v842, %v846
    %850 = vrot.lane.b32.xlu0 %v844, 32
    %v851 = vpop.permute.xlu0 %850
    %v853 = vmul.f32 %v842, %v851
    %855 = vrot.lane.b32.xlu0 %v853, 32
    %v856 = vpop.permute.xlu0 %855
    %v858 = vadd.f32 %v848, %v856
    %v859 = vtanh.pop %v858
    %861 = vrot.lane.b32.xlu0 %v859, 32
    %v862 = vpop.permute.xlu0 %861
    %v864 = vmul.f32 %v842, %v862
    %v866 = vrot.slane %v864, 6
    %867 = vrot.lane.b32.xlu0 %v866, 64
    %v868 = vpop.permute.xlu0 %867
    %v869 = vsel %vm118, %v868, 0
    %871 = vmatprep.subr.mxu0 0.0
    %872 = vmatpush1.msra.mxu0 %v27
    %873 = vmatprep.subr.mxu0 0.0
    %874 = vmatpush1.msra.mxu0 %v28
    %875 = vmatprep.subr.mxu0 0.0
    %876 = vmatpush1.msra.mxu0 %v29
    %877 = vmatprep.subr.mxu0 0.0
    %878 = vmatpush1.msra.mxu0 %v30
    %879 = vmatprep.subr.mxu0 0.0
    %880 = vmatpush1.msra.mxu0 0.0
    %881 = vmatprep.subr.mxu0 0.0
    %882 = vmatpush1.msra.mxu0 0.0
    %883 = vmatprep.subr.mxu0 0.0
    %884 = vmatpush1.msra.mxu0 0.0
    %885 = vmatprep.subr.mxu0 0.0
    %886 = vmatpush1.msra.mxu0 0.0
    %887 = vmatprep.subr.mxu0 0.0
    %888 = vmatpush1.msra.mxu0 0.0
    %889 = vmatprep.subr.mxu0 0.0
    %890 = vmatpush1.msra.mxu0 0.0
    %891 = vmatprep.subr.mxu0 0.0
    %892 = vmatpush1.msra.mxu0 0.0
    %893 = vmatprep.subr.mxu0 0.0
    %894 = vmatpush1.msra.mxu0 0.0
    %895 = vmatprep.subr.mxu0 0.0
    %896 = vmatpush1.msra.mxu0 0.0
    %897 = vmatprep.subr.mxu0 0.0
    %898 = vmatpush1.msra.mxu0 0.0
    %899 = vmatprep.subr.mxu0 0.0
    %900 = vmatpush1.msra.mxu0 0.0
    %901 = vmatprep.subr.mxu0 0.0
    %902 = vmatpush1.msra.mxu0 0.0
    %903 = vmatprep.subr.mxu0 0.0
    %904 = vmatpush1.msra.mxu0 0.0
    %905 = vmatprep.subr.mxu0 0.0
    %906 = vmatpush1.msra.mxu0 0.0
    %907 = vmatprep.subr.mxu0 0.0
    %908 = vmatpush1.msra.mxu0 0.0
    %909 = vmatprep.subr.mxu0 0.0
    %910 = vmatpush1.msra.mxu0 0.0
    %911 = vmatprep.subr.mxu0 0.0
    %912 = vmatpush1.msra.mxu0 0.0
    %913 = vmatprep.subr.mxu0 0.0
    %914 = vmatpush1.msra.mxu0 0.0
    %915 = vmatprep.subr.mxu0 0.0
    %916 = vmatpush1.msra.mxu0 0.0
    %917 = vmatprep.subr.mxu0 0.0
    %918 = vmatpush1.msra.mxu0 0.0
    %919 = vmatprep.subr.mxu0 0.0
    %920 = vmatpush1.msra.mxu0 0.0
    %921 = vmatprep.subr.mxu0 0.0
    %922 = vmatpush1.msra.mxu0 0.0
    %923 = vmatprep.subr.mxu0 0.0
    %924 = vmatpush1.msra.mxu0 0.0
    %925 = vmatprep.subr.mxu0 0.0
    %926 = vmatpush1.msra.mxu0 0.0
    %927 = vmatprep.subr.mxu0 0.0
    %928 = vmatpush1.msra.mxu0 0.0
    %929 = vmatprep.subr.mxu0 0.0
    %930 = vmatpush1.msra.mxu0 0.0
    %931 = vmatprep.subr.mxu0 0.0
    %932 = vmatpush1.msra.mxu0 0.0
    %933 = vmatprep.subr.mxu0 0.0
    %934 = vmatpush1.msra.mxu0 0.0
    %935 = vmatprep.mubr.f32.mxu0 0.0
    %936 = vmatmul.mubr.f32.gmra.mrb[0].mxu0 %v869
    %v937 = vpop.f32.mrb[0].mxu0
    %v938 = vadd.f32 0.0, %v937
    %v939 = vpop.f32.mrb[0].mxu0
    %940 = vdwg.mxu0
    %v942 = vrot.slane %v938, 1
    %v944 = vadd.f32 %v115, %v942
    %v945 = vxor.u32 %v944, 2147483648
    %v946 = vmul.f32 %v945, 1.442695
    %v947 = vpow.pop %v946
    %v948 = vadd.f32 %v947, 1.0
    %v949 = vrcp.pop %v948
    %v950 = vmul.f32 1.0, %v949
    %v951 = vmul.f32 %v950, 2.0
    %v952 = vsub.f32 %v951, 1.0
    %v954 = vrot.slane %v858, 7
    %v956 = vmul.f32 %v950, %v954
    %958 = vrot.lane.b32.xlu0 %v952, 32
    %v959 = vpop.permute.xlu0 %958
    %v961 = vmul.f32 %v950, %v959
    %963 = vrot.lane.b32.xlu0 %v961, 32
    %v964 = vpop.permute.xlu0 %963
    %v966 = vadd.f32 %v956, %v964
    %v967 = vtanh.pop %v966
    %969 = vrot.lane.b32.xlu0 %v967, 32
    %v970 = vpop.permute.xlu0 %969
    %v972 = vmul.f32 %v950, %v970
    %v974 = vrot.slane %v31, 2
    %975 = vrot.lane.b32.xlu0 %v974, 64
    %v976 = vpop.permute.xlu0 %975
    %v978 = vmul.f32 %v972, %v976
    %980 = vrot.lane.b32.xlu0 %v978, 64
    %v981 = vpop.permute.xlu0 %980
    %vm983 = vcmask 261127
    %v984 = vsel %vm983, %v981, 0.0
    %985 = vadd.xlane.f32.xlu0 %v984
    %v986 = vpop.xlane.xlu0 %985
    %v987 = vrot.slane %v31, 3
    %v989 = vadd.f32 %v986, %v987
    %v990 = vxor.u32 %v989, 2147483648
    %v991 = vmul.f32 %v990, 1.442695
    %v992 = vpow.pop %v991
    %v993 = vadd.f32 %v992, 1.0
    %v994 = vrcp.pop %v993
    %v995 = vmul.f32 1.0, %v994
    %vm996 = vcmask 7175
    %997 = vst.msk [vmem:[#allocation5 - $0x7] sm:$0x80] %vm996, %v995
    // Predicated region
    $region14: #{tpu_custom_call.1} parent=1 // pred_check
      _
    $region15: #{tpu_custom_call.1} parent=1 // pred_check_branch
      %999 = sbr.rel (0) target = $region17
    $region16: #{tpu_custom_call.1} parent=1 // pred_region
      %s1001 = ssub.s32 16, 16
      %1002 = vsyncadd [#allocation4], %s1001
      %s1004 = sshll.u32 [#allocation5], 4
      %s1005 = int_to_ptr.vmem [resolvable:$true] %s1004
      %1007 = dma.vmem_to_hbm [thread:$0]  %s1005, 16, %s2, [#allocation4]
    $region17: #{tpu_custom_call.1} parent=1 // pred_fallthru
      _
    // Predicated region
    $region18: #{tpu_custom_call.1} parent=1 // pred_check
      _
    $region19: #{tpu_custom_call.1} parent=1 // pred_check_branch
      %1009 = sbr.rel (0) target = $region21
    $region20: #{tpu_custom_call.1} parent=1 // pred_region
      %1010 = dma.done [#allocation4], 16
    $region21: #{tpu_custom_call.1} parent=1 // pred_fallthru
      _
    %1011 = vsyncpa [#allocation3], 1
    %1012 = vsyncpa [#allocation4], 1

</llo_original>
